<compile_context>
chip_gen: v7x
topology: tpu7x:2x2x1
jax: 0.10.0
libtpu: 0.0.40
codegen_flags: <defaults>
</compile_context>

<pallas_src>
import jax
import jax.numpy as jnp
from jax.experimental import pallas as pl
from jax.experimental.pallas import tpu as pltpu

LN_EPS = 1e-5  # torch.nn.LayerNorm default


def _layernorm(h, gamma, beta):
    """f32 LayerNorm, biased variance (torch default), single-pass moments."""
    mean = jnp.mean(h, axis=-1, keepdims=True)
    mean_sq = jnp.mean(h * h, axis=-1, keepdims=True)
    var = jnp.maximum(mean_sq - mean * mean, 0.0)   # guard f32 cancellation
    inv = jax.lax.rsqrt(var + LN_EPS)               # EUP slot (cheap)
    return (h - mean) * inv * gamma + beta


def critic_kernel(s_ref, a_ref,
                  w1s_ref, w1a_ref, b1_ref, g1_ref, be1_ref,
                  w2_ref, b2_ref, g2_ref, be2_ref,
                  w3_ref, b3_ref,
                  out_ref):
    mx_dtype = w1s_ref.dtype              # matmul operand dtype (bf16 or f32)

    s = s_ref[...].astype(mx_dtype)                            # (TB, S)
    a = a_ref[...].astype(mx_dtype)                            # (TB, A)

    # linear1 (concat fused: x @ W1 == s @ W1[:S] + a @ W1[S:]) -> relu -> ln1
    h1 = (jnp.dot(s, w1s_ref[...], preferred_element_type=jnp.float32)
          + jnp.dot(a, w1a_ref[...], preferred_element_type=jnp.float32)
          + b1_ref[...])
    h1 = jnp.maximum(h1, 0.0)
    h1 = _layernorm(h1, g1_ref[...], be1_ref[...])             # (TB, H1) f32

    # linear2 -> relu -> ln2    (dominant matmul: K = H1)
    h2 = (jnp.dot(h1.astype(mx_dtype), w2_ref[...],
                  preferred_element_type=jnp.float32)
          + b2_ref[...])
    h2 = jnp.maximum(h2, 0.0)
    h2 = _layernorm(h2, g2_ref[...], be2_ref[...])             # (TB, H2) f32

    # linear3 head (out_features = 1): f32 lane reduction (no padded MXU pass).
    q = jnp.sum(h2 * w3_ref[...], axis=-1, keepdims=True) + b3_ref[...]
    out_ref[...] = q                                           # (TB, 1)


def _round_up(x, m):
    return ((x + m - 1) // m) * m


def _pick_tiling(B, max_tile=512):
    """Return (TB, padded_B): TB sublane-aligned (mult of 8), <= max_tile, and
    the batch zero-padded to a TB multiple so the grid never degenerates."""
    if B <= max_tile:
        tb = _round_up(B, 8)
        return tb, tb
    n_tiles = pl.cdiv(B, max_tile)
    tb = _round_up(pl.cdiv(B, n_tiles), 8)
    return tb, tb * n_tiles


def critic_forward(state, action, params, *, use_bf16=True, max_tile=512):
    """state: (B, state_dim), action: (B, n_actions) -> (B, 1) soft Q-values."""
    state = state.astype(jnp.float32)
    action = action.astype(jnp.float32)
    B, S = state.shape
    A = action.shape[1]
    H1 = params["w1_s"].shape[1]
    H2 = params["w2"].shape[1]

    TB, Bp = _pick_tiling(B, max_tile)
    if Bp != B:   # pad batch with zero rows; sliced back off after the call
        state = jnp.pad(state, ((0, Bp - B), (0, 0)))
        action = jnp.pad(action, ((0, Bp - B), (0, 0)))
    grid = (Bp // TB,)

    # bf16 matmul operands (f32 accumulation happens in-kernel); biases, LN
    # params and the head row stay f32.
    mx_dtype = jnp.bfloat16 if use_bf16 else jnp.float32
    w1s = params["w1_s"].astype(mx_dtype)
    w1a = params["w1_a"].astype(mx_dtype)
    w2 = params["w2"].astype(mx_dtype)

    # Batch-tiled activations; weights / LN params stay resident across steps.
    in_specs = [
        pl.BlockSpec((TB, S), lambda i: (i, 0)),      # state
        pl.BlockSpec((TB, A), lambda i: (i, 0)),      # action
        pl.BlockSpec((S, H1), lambda i: (0, 0)),      # w1_s
        pl.BlockSpec((A, H1), lambda i: (0, 0)),      # w1_a
        pl.BlockSpec((1, H1), lambda i: (0, 0)),      # b1
        pl.BlockSpec((1, H1), lambda i: (0, 0)),      # g1
        pl.BlockSpec((1, H1), lambda i: (0, 0)),      # be1
        pl.BlockSpec((H1, H2), lambda i: (0, 0)),     # w2
        pl.BlockSpec((1, H2), lambda i: (0, 0)),      # b2
        pl.BlockSpec((1, H2), lambda i: (0, 0)),      # g2
        pl.BlockSpec((1, H2), lambda i: (0, 0)),      # be2
        pl.BlockSpec((1, H2), lambda i: (0, 0)),      # w3 (row)
        pl.BlockSpec((1, 1), lambda i: (0, 0)),       # b3
    ]
    out_specs = pl.BlockSpec((TB, 1), lambda i: (i, 0))

    out = pl.pallas_call(
        critic_kernel,
        out_shape=jax.ShapeDtypeStruct((Bp, 1), jnp.float32),
        grid=grid,
        in_specs=in_specs,
        out_specs=out_specs,
        compiler_params=pltpu.CompilerParams(
            dimension_semantics=("parallel",),   # megacore-shardable on v7x
            vmem_limit_bytes=16 << 20,
        ),
    )(
        state, action,
        w1s, w1a, params["b1"], params["g1"], params["be1"],
        w2, params["b2"], params["g2"], params["be2"],
        params["w3"], params["b3"],
    )
    return out[:B] if Bp != B else out


def init_params(key, state_dim, n_actions, hidden_dim=(300, 200)):
    """Deterministic synthetic init mirroring the module's parameter shapes."""
    in_dim = state_dim + n_actions
    h1, h2 = hidden_dim
    ks = jax.random.split(key, 6)

    def lin(kw, kb, fan_in, fan_out):
        bound = 1.0 / jnp.sqrt(fan_in)
        w = jax.random.uniform(kw, (fan_in, fan_out), jnp.float32, -bound, bound)
        b = jax.random.uniform(kb, (1, fan_out), jnp.float32, -bound, bound)
        return w, b

    w1, b1 = lin(ks[0], ks[1], in_dim, h1)
    w2, b2 = lin(ks[2], ks[3], h1, h2)
    w3, b3 = lin(ks[4], ks[5], h2, 1)
    return {
        # w1 split so the kernel can fuse the state/action concat.
        "w1_s": w1[:state_dim], "w1_a": w1[state_dim:], "b1": b1,
        "g1": jnp.ones((1, h1), jnp.float32), "be1": jnp.zeros((1, h1), jnp.float32),
        "w2": w2, "b2": b2,
        "g2": jnp.ones((1, h2), jnp.float32), "be2": jnp.zeros((1, h2), jnp.float32),
        "w3": w3.T,            # stored as a (1, h2) row for the lane reduction
        "b3": b3,              # (1, 1)
    }


def critic_ref(state, action, p, matmul_dtype=jnp.float32):
    """Pure-JAX reference mirroring the PyTorch module (matmul dtype selectable)."""
    def ln(h, g, b):
        mean = jnp.mean(h, -1, keepdims=True)
        var = jnp.mean((h - mean) ** 2, -1, keepdims=True)
        return (h - mean) * jax.lax.rsqrt(var + LN_EPS) * g + b

    x = jnp.concatenate([state, action], axis=1).astype(matmul_dtype)
    w1 = jnp.concatenate([p["w1_s"], p["w1_a"]], axis=0).astype(matmul_dtype)
    h1 = jnp.dot(x, w1, preferred_element_type=jnp.float32) + p["b1"]
    h1 = ln(jnp.maximum(h1, 0.0), p["g1"], p["be1"])
    h2 = jnp.dot(h1.astype(matmul_dtype), p["w2"].astype(matmul_dtype),
                 preferred_element_type=jnp.float32) + p["b2"]
    h2 = ln(jnp.maximum(h2, 0.0), p["g2"], p["be2"])
    return h2 @ p["w3"].T + p["b3"]


if __name__ == "__main__":
    key = jax.random.PRNGKey(0)
    k_state, k_action, k_params = jax.random.split(key, 3)

    state_dim = 8
    n_actions = 4
    hidden_dim = (300, 200)  # module defaults
    params = init_params(k_params, state_dim, n_actions, hidden_dim)

    # --- small batch, exact f32 path (matches the torch numerics) -----------
    batch = 4
    state = jax.random.normal(k_state, (batch, state_dim), jnp.float32)
    action = jax.random.normal(k_action, (batch, n_actions), jnp.float32)

    q32 = jax.block_until_ready(critic_forward(state, action, params, use_bf16=False))
    q32_ref = critic_ref(state, action, params, matmul_dtype=jnp.float32)
    assert q32.shape == (batch, 1)
    assert jnp.allclose(q32, q32_ref, atol=1e-4, rtol=1e-4), (q32, q32_ref)

    # --- awkward batch (exercises padding) + default bf16 MXU-operand path ---
    batch2 = 20
    k_s2, k_a2 = jax.random.split(jax.random.PRNGKey(1))
    state2 = jax.random.normal(k_s2, (batch2, state_dim), jnp.float32)
    action2 = jax.random.normal(k_a2, (batch2, n_actions), jnp.float32)

    q16 = jax.block_until_ready(critic_forward(state2, action2, params))
    q16_ref = critic_ref(state2, action2, params, matmul_dtype=jnp.bfloat16)
    assert q16.shape == (batch2, 1)
    assert jnp.allclose(q16, q16_ref, atol=5e-3, rtol=5e-3), (q16, q16_ref)

    print("KERNEL_OK")
</pallas_src>

<mosaic_0001>
module attributes {stable_mosaic.version = 11 : i64} {
  func.func @critic_kernel(%arg0: i32, %arg1: memref<8x8xf32, #tpu.memory_space<vmem>>, %arg2: memref<8x4xf32, #tpu.memory_space<vmem>>, %arg3: memref<8x300xf32, #tpu.memory_space<vmem>>, %arg4: memref<4x300xf32, #tpu.memory_space<vmem>>, %arg5: memref<1x300xf32, #tpu.memory_space<vmem>>, %arg6: memref<1x300xf32, #tpu.memory_space<vmem>>, %arg7: memref<1x300xf32, #tpu.memory_space<vmem>>, %arg8: memref<300x200xf32, #tpu.memory_space<vmem>>, %arg9: memref<1x200xf32, #tpu.memory_space<vmem>>, %arg10: memref<1x200xf32, #tpu.memory_space<vmem>>, %arg11: memref<1x200xf32, #tpu.memory_space<vmem>>, %arg12: memref<1x200xf32, #tpu.memory_space<vmem>>, %arg13: memref<1x1xf32, #tpu.memory_space<vmem>>, %arg14: memref<8x1xf32, #tpu.memory_space<vmem>>) attributes {dimension_semantics = [#tpu.dimension_semantics<parallel>], iteration_bounds = array<i64: 1>, scalar_prefetch = 0 : i64, scratch_operands = 0 : i64, tpu.core_type = #tpu.core_type<tc>, window_params = [{transform_indices = @transform_0, window_bounds = array<i64: 8, 8>}, {transform_indices = @transform_1, window_bounds = array<i64: 8, 4>}, {pipeline_mode = #tpu.pipeline_mode<synchronous>, transform_indices = @transform_2, window_bounds = array<i64: 8, 300>}, {pipeline_mode = #tpu.pipeline_mode<synchronous>, transform_indices = @transform_3, window_bounds = array<i64: 4, 300>}, {pipeline_mode = #tpu.pipeline_mode<synchronous>, transform_indices = @transform_4, window_bounds = array<i64: 1, 300>}, {pipeline_mode = #tpu.pipeline_mode<synchronous>, transform_indices = @transform_5, window_bounds = array<i64: 1, 300>}, {pipeline_mode = #tpu.pipeline_mode<synchronous>, transform_indices = @transform_6, window_bounds = array<i64: 1, 300>}, {pipeline_mode = #tpu.pipeline_mode<synchronous>, transform_indices = @transform_7, window_bounds = array<i64: 300, 200>}, {pipeline_mode = #tpu.pipeline_mode<synchronous>, transform_indices = @transform_8, window_bounds = array<i64: 1, 200>}, {pipeline_mode = #tpu.pipeline_mode<synchronous>, transform_indices = @transform_9, window_bounds = array<i64: 1, 200>}, {pipeline_mode = #tpu.pipeline_mode<synchronous>, transform_indices = @transform_10, window_bounds = array<i64: 1, 200>}, {pipeline_mode = #tpu.pipeline_mode<synchronous>, transform_indices = @transform_11, window_bounds = array<i64: 1, 200>}, {pipeline_mode = #tpu.pipeline_mode<synchronous>, transform_indices = @transform_12, window_bounds = array<i64: 1, 1>}, {transform_indices = @transform_13, window_bounds = array<i64: 8, 1>}]} {
    %c0 = arith.constant 0 : index
    %c0_0 = arith.constant 0 : index
    %0 = vector.load %arg1[%c0, %c0_0] : memref<8x8xf32, #tpu.memory_space<vmem>>, vector<8x8xf32>
    %c0_1 = arith.constant 0 : index
    %c0_2 = arith.constant 0 : index
    %1 = vector.load %arg2[%c0_1, %c0_2] : memref<8x4xf32, #tpu.memory_space<vmem>>, vector<8x4xf32>
    %c0_3 = arith.constant 0 : index
    %c0_4 = arith.constant 0 : index
    %2 = vector.load %arg3[%c0_3, %c0_4] : memref<8x300xf32, #tpu.memory_space<vmem>>, vector<8x300xf32>
    %cst = arith.constant dense<0.000000e+00> : vector<8x300xf32>
    %3 = tpu.matmul %0, %2, %cst {dimension_numbers = #tpu.dot_dimension_numbers<[1], [0], [0], [1], [0, 0, 1, 1], [], []>} : vector<8x8xf32>, vector<8x300xf32>, vector<8x300xf32> -> vector<8x300xf32>
    %c0_5 = arith.constant 0 : index
    %c0_6 = arith.constant 0 : index
    %4 = vector.load %arg4[%c0_5, %c0_6] : memref<4x300xf32, #tpu.memory_space<vmem>>, vector<4x300xf32>
    %cst_7 = arith.constant dense<0.000000e+00> : vector<8x300xf32>
    %5 = tpu.matmul %1, %4, %cst_7 {dimension_numbers = #tpu.dot_dimension_numbers<[1], [0], [0], [1], [0, 0, 1, 1], [], []>} : vector<8x4xf32>, vector<4x300xf32>, vector<8x300xf32> -> vector<8x300xf32>
    %6 = arith.addf %3, %5 : vector<8x300xf32>
    %c0_8 = arith.constant 0 : index
    %c0_9 = arith.constant 0 : index
    %7 = vector.load %arg5[%c0_8, %c0_9] : memref<1x300xf32, #tpu.memory_space<vmem>>, vector<1x300xf32>
    %8 = vector.broadcast %7 : vector<1x300xf32> to vector<8x300xf32>
    %9 = arith.addf %6, %8 : vector<8x300xf32>
    %cst_10 = arith.constant 0.000000e+00 : f32
    %10 = vector.broadcast %cst_10 : f32 to vector<8x300xf32>
    %11 = arith.maximumf %9, %10 : vector<8x300xf32>
    %c0_11 = arith.constant 0 : index
    %c0_12 = arith.constant 0 : index
    %12 = vector.load %arg6[%c0_11, %c0_12] : memref<1x300xf32, #tpu.memory_space<vmem>>, vector<1x300xf32>
    %c0_13 = arith.constant 0 : index
    %c0_14 = arith.constant 0 : index
    %13 = vector.load %arg7[%c0_13, %c0_14] : memref<1x300xf32, #tpu.memory_space<vmem>>, vector<1x300xf32>
    %cst_15 = arith.constant dense<0.000000e+00> : vector<8xf32>
    %14 = vector.multi_reduction <add>, %11, %cst_15 [1] : vector<8x300xf32> to vector<8xf32>
    %15 = vector.shape_cast %14 : vector<8xf32> to vector<8x1xf32>
    %cst_16 = arith.constant 3.000000e+02 : f32
    %16 = vector.broadcast %cst_16 : f32 to vector<8x1xf32>
    %17 = arith.divf %15, %16 : vector<8x1xf32>
    %18 = arith.mulf %11, %11 : vector<8x300xf32>
    %cst_17 = arith.constant dense<0.000000e+00> : vector<8xf32>
    %19 = vector.multi_reduction <add>, %18, %cst_17 [1] : vector<8x300xf32> to vector<8xf32>
    %20 = vector.shape_cast %19 : vector<8xf32> to vector<8x1xf32>
    %cst_18 = arith.constant 3.000000e+02 : f32
    %21 = vector.broadcast %cst_18 : f32 to vector<8x1xf32>
    %22 = arith.divf %20, %21 : vector<8x1xf32>
    %23 = arith.mulf %17, %17 : vector<8x1xf32>
    %24 = arith.subf %22, %23 : vector<8x1xf32>
    %cst_19 = arith.constant 0.000000e+00 : f32
    %25 = vector.broadcast %cst_19 : f32 to vector<8x1xf32>
    %26 = arith.maximumf %24, %25 : vector<8x1xf32>
    %cst_20 = arith.constant 9.99999974E-6 : f32
    %27 = vector.broadcast %cst_20 : f32 to vector<8x1xf32>
    %28 = arith.addf %26, %27 : vector<8x1xf32>
    %29 = math.rsqrt %28 : vector<8x1xf32>
    %30 = vector.broadcast %17 : vector<8x1xf32> to vector<8x300xf32>
    %31 = arith.subf %11, %30 : vector<8x300xf32>
    %32 = vector.broadcast %29 : vector<8x1xf32> to vector<8x300xf32>
    %33 = arith.mulf %31, %32 : vector<8x300xf32>
    %34 = vector.broadcast %12 : vector<1x300xf32> to vector<8x300xf32>
    %35 = arith.mulf %33, %34 : vector<8x300xf32>
    %36 = vector.broadcast %13 : vector<1x300xf32> to vector<8x300xf32>
    %37 = arith.addf %35, %36 : vector<8x300xf32>
    %c0_21 = arith.constant 0 : index
    %c0_22 = arith.constant 0 : index
    %38 = vector.load %arg8[%c0_21, %c0_22] : memref<300x200xf32, #tpu.memory_space<vmem>>, vector<300x200xf32>
    %cst_23 = arith.constant dense<0.000000e+00> : vector<8x200xf32>
    %39 = tpu.matmul %37, %38, %cst_23 {dimension_numbers = #tpu.dot_dimension_numbers<[1], [0], [0], [1], [0, 0, 1, 1], [], []>} : vector<8x300xf32>, vector<300x200xf32>, vector<8x200xf32> -> vector<8x200xf32>
    %c0_24 = arith.constant 0 : index
    %c0_25 = arith.constant 0 : index
    %40 = vector.load %arg9[%c0_24, %c0_25] : memref<1x200xf32, #tpu.memory_space<vmem>>, vector<1x200xf32>
    %41 = vector.broadcast %40 : vector<1x200xf32> to vector<8x200xf32>
    %42 = arith.addf %39, %41 : vector<8x200xf32>
    %cst_26 = arith.constant 0.000000e+00 : f32
    %43 = vector.broadcast %cst_26 : f32 to vector<8x200xf32>
    %44 = arith.maximumf %42, %43 : vector<8x200xf32>
    %c0_27 = arith.constant 0 : index
    %c0_28 = arith.constant 0 : index
    %45 = vector.load %arg10[%c0_27, %c0_28] : memref<1x200xf32, #tpu.memory_space<vmem>>, vector<1x200xf32>
    %c0_29 = arith.constant 0 : index
    %c0_30 = arith.constant 0 : index
    %46 = vector.load %arg11[%c0_29, %c0_30] : memref<1x200xf32, #tpu.memory_space<vmem>>, vector<1x200xf32>
    %cst_31 = arith.constant dense<0.000000e+00> : vector<8xf32>
    %47 = vector.multi_reduction <add>, %44, %cst_31 [1] : vector<8x200xf32> to vector<8xf32>
    %48 = vector.shape_cast %47 : vector<8xf32> to vector<8x1xf32>
    %cst_32 = arith.constant 2.000000e+02 : f32
    %49 = vector.broadcast %cst_32 : f32 to vector<8x1xf32>
    %50 = arith.divf %48, %49 : vector<8x1xf32>
    %51 = arith.mulf %44, %44 : vector<8x200xf32>
    %cst_33 = arith.constant dense<0.000000e+00> : vector<8xf32>
    %52 = vector.multi_reduction <add>, %51, %cst_33 [1] : vector<8x200xf32> to vector<8xf32>
    %53 = vector.shape_cast %52 : vector<8xf32> to vector<8x1xf32>
    %cst_34 = arith.constant 2.000000e+02 : f32
    %54 = vector.broadcast %cst_34 : f32 to vector<8x1xf32>
    %55 = arith.divf %53, %54 : vector<8x1xf32>
    %56 = arith.mulf %50, %50 : vector<8x1xf32>
    %57 = arith.subf %55, %56 : vector<8x1xf32>
    %cst_35 = arith.constant 0.000000e+00 : f32
    %58 = vector.broadcast %cst_35 : f32 to vector<8x1xf32>
    %59 = arith.maximumf %57, %58 : vector<8x1xf32>
    %cst_36 = arith.constant 9.99999974E-6 : f32
    %60 = vector.broadcast %cst_36 : f32 to vector<8x1xf32>
    %61 = arith.addf %59, %60 : vector<8x1xf32>
    %62 = math.rsqrt %61 : vector<8x1xf32>
    %63 = vector.broadcast %50 : vector<8x1xf32> to vector<8x200xf32>
    %64 = arith.subf %44, %63 : vector<8x200xf32>
    %65 = vector.broadcast %62 : vector<8x1xf32> to vector<8x200xf32>
    %66 = arith.mulf %64, %65 : vector<8x200xf32>
    %67 = vector.broadcast %45 : vector<1x200xf32> to vector<8x200xf32>
    %68 = arith.mulf %66, %67 : vector<8x200xf32>
    %69 = vector.broadcast %46 : vector<1x200xf32> to vector<8x200xf32>
    %70 = arith.addf %68, %69 : vector<8x200xf32>
    %c0_37 = arith.constant 0 : index
    %c0_38 = arith.constant 0 : index
    %71 = vector.load %arg12[%c0_37, %c0_38] : memref<1x200xf32, #tpu.memory_space<vmem>>, vector<1x200xf32>
    %72 = vector.broadcast %71 : vector<1x200xf32> to vector<8x200xf32>
    %73 = arith.mulf %70, %72 : vector<8x200xf32>
    %cst_39 = arith.constant dense<0.000000e+00> : vector<8xf32>
    %74 = vector.multi_reduction <add>, %73, %cst_39 [1] : vector<8x200xf32> to vector<8xf32>
    %75 = vector.shape_cast %74 : vector<8xf32> to vector<8x1xf32>
    %c0_40 = arith.constant 0 : index
    %c0_41 = arith.constant 0 : index
    %76 = vector.load %arg13[%c0_40, %c0_41] : memref<1x1xf32, #tpu.memory_space<vmem>>, vector<1x1xf32>
    %77 = vector.broadcast %76 : vector<1x1xf32> to vector<8x1xf32>
    %78 = arith.addf %75, %77 : vector<8x1xf32>
    %c0_42 = arith.constant 0 : index
    %c0_43 = arith.constant 0 : index
    %79 = vector.load %arg14[%c0_42, %c0_43] : memref<8x1xf32, #tpu.memory_space<vmem>>, vector<8x1xf32>
    tpu.vector_store %arg14[%c0_42, %c0_43], %78 {strides = array<i32>} : memref<8x1xf32, #tpu.memory_space<vmem>>, vector<8x1xf32>,
    return
  }
  func.func @transform_0(%arg0: i32) -> (i32, i32) {
    %c0_i32 = arith.constant 0 : i32
    %c0_i32_0 = arith.constant 0 : i32
    return %arg0, %c0_i32 : i32, i32
  }
  func.func @transform_1(%arg0: i32) -> (i32, i32) {
    %c0_i32 = arith.constant 0 : i32
    %c0_i32_0 = arith.constant 0 : i32
    return %arg0, %c0_i32 : i32, i32
  }
  func.func @transform_2(%arg0: i32) -> (i32, i32) {
    %c0_i32 = arith.constant 0 : i32
    %c0_i32_0 = arith.constant 0 : i32
    %c0_i32_1 = arith.constant 0 : i32
    return %c0_i32, %c0_i32_0 : i32, i32
  }
  func.func @transform_3(%arg0: i32) -> (i32, i32) {
    %c0_i32 = arith.constant 0 : i32
    %c0_i32_0 = arith.constant 0 : i32
    %c0_i32_1 = arith.constant 0 : i32
    return %c0_i32, %c0_i32_0 : i32, i32
  }
  func.func @transform_4(%arg0: i32) -> (i32, i32) {
    %c0_i32 = arith.constant 0 : i32
    %c0_i32_0 = arith.constant 0 : i32
    %c0_i32_1 = arith.constant 0 : i32
    return %c0_i32, %c0_i32_0 : i32, i32
  }
  func.func @transform_5(%arg0: i32) -> (i32, i32) {
    %c0_i32 = arith.constant 0 : i32
    %c0_i32_0 = arith.constant 0 : i32
    %c0_i32_1 = arith.constant 0 : i32
    return %c0_i32, %c0_i32_0 : i32, i32
  }
  func.func @transform_6(%arg0: i32) -> (i32, i32) {
    %c0_i32 = arith.constant 0 : i32
    %c0_i32_0 = arith.constant 0 : i32
    %c0_i32_1 = arith.constant 0 : i32
    return %c0_i32, %c0_i32_0 : i32, i32
  }
  func.func @transform_7(%arg0: i32) -> (i32, i32) {
    %c0_i32 = arith.constant 0 : i32
    %c0_i32_0 = arith.constant 0 : i32
    %c0_i32_1 = arith.constant 0 : i32
    return %c0_i32, %c0_i32_0 : i32, i32
  }
  func.func @transform_8(%arg0: i32) -> (i32, i32) {
    %c0_i32 = arith.constant 0 : i32
    %c0_i32_0 = arith.constant 0 : i32
    %c0_i32_1 = arith.constant 0 : i32
    return %c0_i32, %c0_i32_0 : i32, i32
  }
  func.func @transform_9(%arg0: i32) -> (i32, i32) {
    %c0_i32 = arith.constant 0 : i32
    %c0_i32_0 = arith.constant 0 : i32
    %c0_i32_1 = arith.constant 0 : i32
    return %c0_i32, %c0_i32_0 : i32, i32
  }
  func.func @transform_10(%arg0: i32) -> (i32, i32) {
    %c0_i32 = arith.constant 0 : i32
    %c0_i32_0 = arith.constant 0 : i32
    %c0_i32_1 = arith.constant 0 : i32
    return %c0_i32, %c0_i32_0 : i32, i32
  }
  func.func @transform_11(%arg0: i32) -> (i32, i32) {
    %c0_i32 = arith.constant 0 : i32
    %c0_i32_0 = arith.constant 0 : i32
    %c0_i32_1 = arith.constant 0 : i32
    return %c0_i32, %c0_i32_0 : i32, i32
  }
  func.func @transform_12(%arg0: i32) -> (i32, i32) {
    %c0_i32 = arith.constant 0 : i32
    %c0_i32_0 = arith.constant 0 : i32
    %c0_i32_1 = arith.constant 0 : i32
    return %c0_i32, %c0_i32_0 : i32, i32
  }
  func.func @transform_13(%arg0: i32) -> (i32, i32) {
    %c0_i32 = arith.constant 0 : i32
    %c0_i32_0 = arith.constant 0 : i32
    return %arg0, %c0_i32 : i32, i32
  }
}

</mosaic_0001>

<llo_original>
// kernel: tpu_custom_call.1
$region0: #{tpu_custom_call.1}
  #allocation0 [shape = 'u32[]', space=smem, size = 0x4, offset = 0x4, fixed_abs, tag = 'smem constant byte address 0x4 - core index']
  #allocation1 [shape = 'u32[144,128]{1,0:T(1,128)}', space=vmem, size = 0x12000, scoped, tag = 'internal scratch']
  #allocation2 [shape = 'f32[1,1]{1,0:T(1,128)S(1)}', space=vmem, size = 0x200, scoped, tag = 'scoped memory for tpu_custom_call.1']
  %s0 = inlined_call_operand.vmem [shape: f32[8,8], index: 0, kind: input, shape index: {}]
  %s1 = inlined_call_operand.vmem [shape: f32[8,4], index: 1, kind: input, shape index: {}]
  %s2 = inlined_call_operand.vmem [shape: f32[8,300], index: 2, kind: input, shape index: {}]
  %s3 = inlined_call_operand.vmem [shape: f32[4,300], index: 3, kind: input, shape index: {}]
  %s4 = inlined_call_operand.vmem [shape: f32[1,300], index: 4, kind: input, shape index: {}]
  %s5 = inlined_call_operand.vmem [shape: f32[1,300], index: 5, kind: input, shape index: {}]
  %s6 = inlined_call_operand.vmem [shape: f32[1,300], index: 6, kind: input, shape index: {}]
  %s7 = inlined_call_operand.vmem [shape: f32[300,200], index: 7, kind: input, shape index: {}]
  %s8 = inlined_call_operand.vmem [shape: f32[1,200], index: 8, kind: input, shape index: {}]
  %s9 = inlined_call_operand.vmem [shape: f32[1,200], index: 9, kind: input, shape index: {}]
  %s10 = inlined_call_operand.vmem [shape: f32[1,200], index: 10, kind: input, shape index: {}]
  %s11 = inlined_call_operand.vmem [shape: f32[1,200], index: 11, kind: input, shape index: {}]
  %s12 = inlined_call_operand.<no memory space> [shape: f32[1,1], index: 12, kind: input, shape index: {}]
  %s13 = inlined_call_operand.vmem [shape: f32[8,1], index: 13, kind: output, shape index: {}]
  %s14 = sld [smem:[#allocation0]]
  $region62: #{tpu_custom_call.1} parent=0
    _
  %s16 = ssub.s32 1, %s14
  %s17 = scalar_select 0, %s16, %s14
  %v18 = vstv %s12
  %19 = vst [vmem:[#allocation2] sm:$0x1] %v18
  // Predicated region
  $region2: #{tpu_custom_call.1} parent=0 // pred_check
    _
  $region3: #{tpu_custom_call.1} parent=0 // pred_check_branch
    %21 = sbr.rel (0) target = $region5
  $region4: #{tpu_custom_call.1} parent=0 // pred_region
    _
  $region5: #{tpu_custom_call.1} parent=0 // pred_fallthru
    _
  // Predicated region
  $region6: #{tpu_custom_call.1} parent=0 // pred_check
    _
  $region7: #{tpu_custom_call.1} parent=0 // pred_check_branch
    %23 = sbr.rel (0) target = $region9
  $region8: #{tpu_custom_call.1} parent=0 // pred_region
    _
  $region9: #{tpu_custom_call.1} parent=0 // pred_fallthru
    _
  // Predicated region
  $region10: #{tpu_custom_call.1} parent=0 // pred_check
    _
  $region11: #{tpu_custom_call.1} parent=0 // pred_check_branch
    %25 = sbr.rel (0) target = $region13
  $region12: #{tpu_custom_call.1} parent=0 // pred_region
    _
  $region13: #{tpu_custom_call.1} parent=0 // pred_fallthru
    _
  // Predicated region
  $region14: #{tpu_custom_call.1} parent=0 // pred_check
    _
  $region15: #{tpu_custom_call.1} parent=0 // pred_check_branch
    %27 = sbr.rel (0) target = $region17
  $region16: #{tpu_custom_call.1} parent=0 // pred_region
    _
  $region17: #{tpu_custom_call.1} parent=0 // pred_fallthru
    _
  // Predicated region
  $region18: #{tpu_custom_call.1} parent=0 // pred_check
    _
  $region19: #{tpu_custom_call.1} parent=0 // pred_check_branch
    %29 = sbr.rel (0) target = $region21
  $region20: #{tpu_custom_call.1} parent=0 // pred_region
    _
  $region21: #{tpu_custom_call.1} parent=0 // pred_fallthru
    _
  // Predicated region
  $region22: #{tpu_custom_call.1} parent=0 // pred_check
    _
  $region23: #{tpu_custom_call.1} parent=0 // pred_check_branch
    %31 = sbr.rel (0) target = $region25
  $region24: #{tpu_custom_call.1} parent=0 // pred_region
    _
  $region25: #{tpu_custom_call.1} parent=0 // pred_fallthru
    _
  // Predicated region
  $region26: #{tpu_custom_call.1} parent=0 // pred_check
    _
  $region27: #{tpu_custom_call.1} parent=0 // pred_check_branch
    %33 = sbr.rel (0) target = $region29
  $region28: #{tpu_custom_call.1} parent=0 // pred_region
    _
  $region29: #{tpu_custom_call.1} parent=0 // pred_fallthru
    _
  // Predicated region
  $region30: #{tpu_custom_call.1} parent=0 // pred_check
    _
  $region31: #{tpu_custom_call.1} parent=0 // pred_check_branch
    %35 = sbr.rel (0) target = $region33
  $region32: #{tpu_custom_call.1} parent=0 // pred_region
    _
  $region33: #{tpu_custom_call.1} parent=0 // pred_fallthru
    _
  // Predicated region
  $region34: #{tpu_custom_call.1} parent=0 // pred_check
    _
  $region35: #{tpu_custom_call.1} parent=0 // pred_check_branch
    %37 = sbr.rel (0) target = $region37
  $region36: #{tpu_custom_call.1} parent=0 // pred_region
    _
  $region37: #{tpu_custom_call.1} parent=0 // pred_fallthru
    _
  // Predicated region
  $region38: #{tpu_custom_call.1} parent=0 // pred_check
    _
  $region39: #{tpu_custom_call.1} parent=0 // pred_check_branch
    %39 = sbr.rel (0) target = $region41
  $region40: #{tpu_custom_call.1} parent=0 // pred_region
    _
  $region41: #{tpu_custom_call.1} parent=0 // pred_fallthru
    _
  // Predicated region
  $region42: #{tpu_custom_call.1} parent=0 // pred_check
    _
  $region43: #{tpu_custom_call.1} parent=0 // pred_check_branch
    %41 = sbr.rel (0) target = $region45
  $region44: #{tpu_custom_call.1} parent=0 // pred_region
    _
  $region45: #{tpu_custom_call.1} parent=0 // pred_fallthru
    _
  // Predicated region
  $region46: #{tpu_custom_call.1} parent=0 // pred_check
    _
  $region47: #{tpu_custom_call.1} parent=0 // pred_check_branch
    %43 = sbr.rel (0) target = $region49
  $region48: #{tpu_custom_call.1} parent=0 // pred_region
    _
  $region49: #{tpu_custom_call.1} parent=0 // pred_fallthru
    _
  // Predicated region
  $region50: #{tpu_custom_call.1} parent=0 // pred_check
    _
  $region51: #{tpu_custom_call.1} parent=0 // pred_check_branch
    %45 = sbr.rel (0) target = $region53
  $region52: #{tpu_custom_call.1} parent=0 // pred_region
    _
  $region53: #{tpu_custom_call.1} parent=0 // pred_fallthru
    _
  %v46 = vld [vmem:[%s0] sm:$0xff]
  %v47 = vld [vmem:[%s1] sm:$0xff]
  %v48 = vld [vmem:[%s2] sm:$0xff]
  %v49 = vld [vmem:[%s2 + $0x8] sm:$0xff]
  %v50 = vld [vmem:[%s2 + $0x10] sm:$0xff]
  %v51 = vld [vmem:[%s3] sm:$0xff]
  %v52 = vld [vmem:[%s3 + $0x8] sm:$0xf]
  %v55 = vcombine.high %v51, %v51
  %vm56 = vcmask 31744
  %v58 = vsel %vm56, %v47, 0
  %vm60 = vcmask 1043456
  %v61 = vsel %vm60, %v51, 0
  %v63 = vsel %vm60, %v55, 0
  %v65 = vsel %vm60, %v52, 0
  %67 = vmatprep.subr.mxu0 %v63
  %68 = vmatpush1.msra.mxu0 %v61
  %69 = vmatprep.subr.mxu0 0.0
  %70 = vmatpush1.msra.mxu0 0.0
  %71 = vmatprep.subr.mxu0 0.0
  %72 = vmatpush1.msra.mxu0 0.0
  %73 = vmatprep.subr.mxu0 0.0
  %74 = vmatpush1.msra.mxu0 0.0
  %75 = vmatprep.subr.mxu0 0.0
  %76 = vmatpush1.msra.mxu0 0.0
  %77 = vmatprep.subr.mxu0 0.0
  %78 = vmatpush1.msra.mxu0 0.0
  %79 = vmatprep.subr.mxu0 0.0
  %80 = vmatpush1.msra.mxu0 0.0
  %81 = vmatprep.subr.mxu0 0.0
  %82 = vmatpush1.msra.mxu0 0.0
  %83 = vmatprep.subr.mxu0 0.0
  %84 = vmatpush1.msra.mxu0 0.0
  %85 = vmatprep.subr.mxu0 0.0
  %86 = vmatpush1.msra.mxu0 0.0
  %87 = vmatprep.subr.mxu0 0.0
  %88 = vmatpush1.msra.mxu0 0.0
  %89 = vmatprep.subr.mxu0 0.0
  %90 = vmatpush1.msra.mxu0 0.0
  %91 = vmatprep.subr.mxu0 0.0
  %92 = vmatpush1.msra.mxu0 0.0
  %93 = vmatprep.subr.mxu0 0.0
  %94 = vmatpush1.msra.mxu0 0.0
  %95 = vmatprep.subr.mxu0 0.0
  %96 = vmatpush1.msra.mxu0 0.0
  %97 = vmatprep.subr.mxu0 0.0
  %98 = vmatpush1.msra.mxu0 0.0
  %99 = vmatprep.subr.mxu0 0.0
  %100 = vmatpush1.msra.mxu0 0.0
  %101 = vmatprep.subr.mxu0 0.0
  %102 = vmatpush1.msra.mxu0 0.0
  %103 = vmatprep.subr.mxu0 0.0
  %104 = vmatpush1.msra.mxu0 0.0
  %105 = vmatprep.subr.mxu0 0.0
  %106 = vmatpush1.msra.mxu0 0.0
  %107 = vmatprep.subr.mxu0 0.0
  %108 = vmatpush1.msra.mxu0 0.0
  %109 = vmatprep.subr.mxu0 0.0
  %110 = vmatpush1.msra.mxu0 0.0
  %111 = vmatprep.subr.mxu0 0.0
  %112 = vmatpush1.msra.mxu0 0.0
  %113 = vmatprep.subr.mxu0 0.0
  %114 = vmatpush1.msra.mxu0 0.0
  %115 = vmatprep.subr.mxu0 0.0
  %116 = vmatpush1.msra.mxu0 0.0
  %117 = vmatprep.subr.mxu0 0.0
  %118 = vmatpush1.msra.mxu0 0.0
  %119 = vmatprep.subr.mxu0 0.0
  %120 = vmatpush1.msra.mxu0 0.0
  %121 = vmatprep.subr.mxu0 0.0
  %122 = vmatpush1.msra.mxu0 0.0
  %123 = vmatprep.subr.mxu0 0.0
  %124 = vmatpush1.msra.mxu0 0.0
  %125 = vmatprep.subr.mxu0 0.0
  %126 = vmatpush1.msra.mxu0 0.0
  %127 = vmatprep.subr.mxu0 0.0
  %128 = vmatpush1.msra.mxu0 0.0
  %129 = vmatprep.subr.mxu0 0.0
  %130 = vmatpush1.msra.mxu0 0.0
  %131 = vmatprep.mubr.f32.mxu0 0.0
  %132 = vmatmul.mubr.f32.gmra.mrb[0].mxu0 %v58
  %v133 = vpop.f32.mrb[0].mxu0
  %v134 = vadd.f32 0.0, %v133
  %v135 = vpop.f32.mrb[0].mxu0
  %v136 = vadd.f32 0.0, %v135
  %137 = vdwg.mxu0
  %138 = vmatprep.subr.mxu0 0.0
  %139 = vmatpush1.msra.mxu0 %v65
  %140 = vmatprep.subr.mxu0 0.0
  %141 = vmatpush1.msra.mxu0 0.0
  %142 = vmatprep.subr.mxu0 0.0
  %143 = vmatpush1.msra.mxu0 0.0
  %144 = vmatprep.subr.mxu0 0.0
  %145 = vmatpush1.msra.mxu0 0.0
  %146 = vmatprep.subr.mxu0 0.0
  %147 = vmatpush1.msra.mxu0 0.0
  %148 = vmatprep.subr.mxu0 0.0
  %149 = vmatpush1.msra.mxu0 0.0
  %150 = vmatprep.subr.mxu0 0.0
  %151 = vmatpush1.msra.mxu0 0.0
  %152 = vmatprep.subr.mxu0 0.0
  %153 = vmatpush1.msra.mxu0 0.0
  %154 = vmatprep.subr.mxu0 0.0
  %155 = vmatpush1.msra.mxu0 0.0
  %156 = vmatprep.subr.mxu0 0.0
  %157 = vmatpush1.msra.mxu0 0.0
  %158 = vmatprep.subr.mxu0 0.0
  %159 = vmatpush1.msra.mxu0 0.0
  %160 = vmatprep.subr.mxu0 0.0
  %161 = vmatpush1.msra.mxu0 0.0
  %162 = vmatprep.subr.mxu0 0.0
  %163 = vmatpush1.msra.mxu0 0.0
  %164 = vmatprep.subr.mxu0 0.0
  %165 = vmatpush1.msra.mxu0 0.0
  %166 = vmatprep.subr.mxu0 0.0
  %167 = vmatpush1.msra.mxu0 0.0
  %168 = vmatprep.subr.mxu0 0.0
  %169 = vmatpush1.msra.mxu0 0.0
  %170 = vmatprep.subr.mxu0 0.0
  %171 = vmatpush1.msra.mxu0 0.0
  %172 = vmatprep.subr.mxu0 0.0
  %173 = vmatpush1.msra.mxu0 0.0
  %174 = vmatprep.subr.mxu0 0.0
  %175 = vmatpush1.msra.mxu0 0.0
  %176 = vmatprep.subr.mxu0 0.0
  %177 = vmatpush1.msra.mxu0 0.0
  %178 = vmatprep.subr.mxu0 0.0
  %179 = vmatpush1.msra.mxu0 0.0
  %180 = vmatprep.subr.mxu0 0.0
  %181 = vmatpush1.msra.mxu0 0.0
  %182 = vmatprep.subr.mxu0 0.0
  %183 = vmatpush1.msra.mxu0 0.0
  %184 = vmatprep.subr.mxu0 0.0
  %185 = vmatpush1.msra.mxu0 0.0
  %186 = vmatprep.subr.mxu0 0.0
  %187 = vmatpush1.msra.mxu0 0.0
  %188 = vmatprep.subr.mxu0 0.0
  %189 = vmatpush1.msra.mxu0 0.0
  %190 = vmatprep.subr.mxu0 0.0
  %191 = vmatpush1.msra.mxu0 0.0
  %192 = vmatprep.subr.mxu0 0.0
  %193 = vmatpush1.msra.mxu0 0.0
  %194 = vmatprep.subr.mxu0 0.0
  %195 = vmatpush1.msra.mxu0 0.0
  %196 = vmatprep.subr.mxu0 0.0
  %197 = vmatpush1.msra.mxu0 0.0
  %198 = vmatprep.subr.mxu0 0.0
  %199 = vmatpush1.msra.mxu0 0.0
  %200 = vmatprep.subr.mxu0 0.0
  %201 = vmatpush1.msra.mxu0 0.0
  %202 = vmatprep.mubr.f32.mxu0 0.0
  %203 = vmatmul.mubr.f32.gmra.mrb[0].mxu0 %v58
  %v204 = vpop.f32.mrb[0].mxu0
  %v205 = vadd.f32 0.0, %v204
  %v206 = vpop.f32.mrb[0].mxu0
  %207 = vdwg.mxu0
  %vm208 = vcmask 64512
  %v210 = vsel %vm208, %v46, 0
  %212 = vmatprep.subr.mxu0 %v49
  %213 = vmatpush1.msra.mxu0 %v48
  %214 = vmatprep.subr.mxu0 0.0
  %215 = vmatpush1.msra.mxu0 0.0
  %216 = vmatprep.subr.mxu0 0.0
  %217 = vmatpush1.msra.mxu0 0.0
  %218 = vmatprep.subr.mxu0 0.0
  %219 = vmatpush1.msra.mxu0 0.0
  %220 = vmatprep.subr.mxu0 0.0
  %221 = vmatpush1.msra.mxu0 0.0
  %222 = vmatprep.subr.mxu0 0.0
  %223 = vmatpush1.msra.mxu0 0.0
  %224 = vmatprep.subr.mxu0 0.0
  %225 = vmatpush1.msra.mxu0 0.0
  %226 = vmatprep.subr.mxu0 0.0
  %227 = vmatpush1.msra.mxu0 0.0
  %228 = vmatprep.subr.mxu0 0.0
  %229 = vmatpush1.msra.mxu0 0.0
  %230 = vmatprep.subr.mxu0 0.0
  %231 = vmatpush1.msra.mxu0 0.0
  %232 = vmatprep.subr.mxu0 0.0
  %233 = vmatpush1.msra.mxu0 0.0
  %234 = vmatprep.subr.mxu0 0.0
  %235 = vmatpush1.msra.mxu0 0.0
  %236 = vmatprep.subr.mxu0 0.0
  %237 = vmatpush1.msra.mxu0 0.0
  %238 = vmatprep.subr.mxu0 0.0
  %239 = vmatpush1.msra.mxu0 0.0
  %240 = vmatprep.subr.mxu0 0.0
  %241 = vmatpush1.msra.mxu0 0.0
  %242 = vmatprep.subr.mxu0 0.0
  %243 = vmatpush1.msra.mxu0 0.0
  %244 = vmatprep.subr.mxu0 0.0
  %245 = vmatpush1.msra.mxu0 0.0
  %246 = vmatprep.subr.mxu0 0.0
  %247 = vmatpush1.msra.mxu0 0.0
  %248 = vmatprep.subr.mxu0 0.0
  %249 = vmatpush1.msra.mxu0 0.0
  %250 = vmatprep.subr.mxu0 0.0
  %251 = vmatpush1.msra.mxu0 0.0
  %252 = vmatprep.subr.mxu0 0.0
  %253 = vmatpush1.msra.mxu0 0.0
  %254 = vmatprep.subr.mxu0 0.0
  %255 = vmatpush1.msra.mxu0 0.0
  %256 = vmatprep.subr.mxu0 0.0
  %257 = vmatpush1.msra.mxu0 0.0
  %258 = vmatprep.subr.mxu0 0.0
  %259 = vmatpush1.msra.mxu0 0.0
  %260 = vmatprep.subr.mxu0 0.0
  %261 = vmatpush1.msra.mxu0 0.0
  %262 = vmatprep.subr.mxu0 0.0
  %263 = vmatpush1.msra.mxu0 0.0
  %264 = vmatprep.subr.mxu0 0.0
  %265 = vmatpush1.msra.mxu0 0.0
  %266 = vmatprep.subr.mxu0 0.0
  %267 = vmatpush1.msra.mxu0 0.0
  %268 = vmatprep.subr.mxu0 0.0
  %269 = vmatpush1.msra.mxu0 0.0
  %270 = vmatprep.subr.mxu0 0.0
  %271 = vmatpush1.msra.mxu0 0.0
  %272 = vmatprep.subr.mxu0 0.0
  %273 = vmatpush1.msra.mxu0 0.0
  %274 = vmatprep.subr.mxu0 0.0
  %275 = vmatpush1.msra.mxu0 0.0
  %276 = vmatprep.mubr.f32.mxu0 0.0
  %277 = vmatmul.mubr.f32.gmra.mrb[0].mxu0 %v210
  %v278 = vpop.f32.mrb[0].mxu0
  %v279 = vadd.f32 %v134, %v278
  %v280 = vpop.f32.mrb[0].mxu0
  %v281 = vadd.f32 %v136, %v280
  %282 = vdwg.mxu0
  %283 = vmatprep.subr.mxu0 0.0
  %284 = vmatpush1.msra.mxu0 %v50
  %285 = vmatprep.subr.mxu0 0.0
  %286 = vmatpush1.msra.mxu0 0.0
  %287 = vmatprep.subr.mxu0 0.0
  %288 = vmatpush1.msra.mxu0 0.0
  %289 = vmatprep.subr.mxu0 0.0
  %290 = vmatpush1.msra.mxu0 0.0
  %291 = vmatprep.subr.mxu0 0.0
  %292 = vmatpush1.msra.mxu0 0.0
  %293 = vmatprep.subr.mxu0 0.0
  %294 = vmatpush1.msra.mxu0 0.0
  %295 = vmatprep.subr.mxu0 0.0
  %296 = vmatpush1.msra.mxu0 0.0
  %297 = vmatprep.subr.mxu0 0.0
  %298 = vmatpush1.msra.mxu0 0.0
  %299 = vmatprep.subr.mxu0 0.0
  %300 = vmatpush1.msra.mxu0 0.0
  %301 = vmatprep.subr.mxu0 0.0
  %302 = vmatpush1.msra.mxu0 0.0
  %303 = vmatprep.subr.mxu0 0.0
  %304 = vmatpush1.msra.mxu0 0.0
  %305 = vmatprep.subr.mxu0 0.0
  %306 = vmatpush1.msra.mxu0 0.0
  %307 = vmatprep.subr.mxu0 0.0
  %308 = vmatpush1.msra.mxu0 0.0
  %309 = vmatprep.subr.mxu0 0.0
  %310 = vmatpush1.msra.mxu0 0.0
  %311 = vmatprep.subr.mxu0 0.0
  %312 = vmatpush1.msra.mxu0 0.0
  %313 = vmatprep.subr.mxu0 0.0
  %314 = vmatpush1.msra.mxu0 0.0
  %315 = vmatprep.subr.mxu0 0.0
  %316 = vmatpush1.msra.mxu0 0.0
  %317 = vmatprep.subr.mxu0 0.0
  %318 = vmatpush1.msra.mxu0 0.0
  %319 = vmatprep.subr.mxu0 0.0
  %320 = vmatpush1.msra.mxu0 0.0
  %321 = vmatprep.subr.mxu0 0.0
  %322 = vmatpush1.msra.mxu0 0.0
  %323 = vmatprep.subr.mxu0 0.0
  %324 = vmatpush1.msra.mxu0 0.0
  %325 = vmatprep.subr.mxu0 0.0
  %326 = vmatpush1.msra.mxu0 0.0
  %327 = vmatprep.subr.mxu0 0.0
  %328 = vmatpush1.msra.mxu0 0.0
  %329 = vmatprep.subr.mxu0 0.0
  %330 = vmatpush1.msra.mxu0 0.0
  %331 = vmatprep.subr.mxu0 0.0
  %332 = vmatpush1.msra.mxu0 0.0
  %333 = vmatprep.subr.mxu0 0.0
  %334 = vmatpush1.msra.mxu0 0.0
  %335 = vmatprep.subr.mxu0 0.0
  %336 = vmatpush1.msra.mxu0 0.0
  %337 = vmatprep.subr.mxu0 0.0
  %338 = vmatpush1.msra.mxu0 0.0
  %339 = vmatprep.subr.mxu0 0.0
  %340 = vmatpush1.msra.mxu0 0.0
  %341 = vmatprep.subr.mxu0 0.0
  %342 = vmatpush1.msra.mxu0 0.0
  %343 = vmatprep.subr.mxu0 0.0
  %344 = vmatpush1.msra.mxu0 0.0
  %345 = vmatprep.subr.mxu0 0.0
  %346 = vmatpush1.msra.mxu0 0.0
  %347 = vmatprep.mubr.f32.mxu0 0.0
  %348 = vmatmul.mubr.f32.gmra.mrb[0].mxu0 %v210
  %v349 = vpop.f32.mrb[0].mxu0
  %v350 = vadd.f32 %v205, %v349
  %v351 = vpop.f32.mrb[0].mxu0
  %352 = vdwg.mxu0
  %v353 = vld [vmem:[%s4] sm:$0x7]
  %v355 = vlaneseq
  %v356 = vshrl.u32 %v355, 7
  %v357 = vsub.s32 0, %v356
  %v358 = vrot.slane %v353, %v357
  %v359 = vlaneseq
  %v360 = vshrl.u32 %v359, 7
  %v361 = vsub.s32 1, %v360
  %v362 = vrot.slane %v353, %v361
  %v363 = vlaneseq
  %v364 = vshrl.u32 %v363, 7
  %v365 = vsub.s32 2, %v364
  %v366 = vrot.slane %v353, %v365
  %v370 = vadd.f32 %v279, %v358
  %v371 = vadd.f32 %v281, %v362
  %v372 = vadd.f32 %v350, %v366
  %v373 = vmax.f32 %v370, 0.0
  %v374 = vmax.f32 %v371, 0.0
  %v375 = vmax.f32 %v372, 0.0
  %v376 = vld [vmem:[%s5] sm:$0x7]
  %v377 = vld [vmem:[%s6] sm:$0x7]
  %v378 = vadd.f32 %v373, %v374
  %vm379 = vcmask 359424
  %v380 = vsel %vm379, %v375, 0.0
  %v381 = vadd.f32 %v378, %v380
  %382 = vadd.xlane.f32.xlu0 %v381
  %v383 = vpop.xlane.xlu0 %382
  %v384 = vrcp.pop 300.0
  %v385 = vmul.f32 %v383, %v384
  %v386 = vmul.f32 %v373, %v373
  %v387 = vmul.f32 %v374, %v374
  %v388 = vmul.f32 %v375, %v375
  %v389 = vadd.f32 %v386, %v387
  %v390 = vsel %vm379, %v388, 0.0
  %v391 = vadd.f32 %v389, %v390
  %392 = vadd.xlane.f32.xlu0 %v391
  %v393 = vpop.xlane.xlu0 %392
  %v394 = vmul.f32 %v393, %v384
  %v395 = vmul.f32 %v385, %v385
  %v396 = vsub.f32 %v394, %v395
  %v397 = vmax.f32 %v396, 0.0
  %v398 = vadd.f32 %v397, 1e-05
  %v399 = vrsqrt.pop %v398
  %v400 = vsub.f32 %v373, %v385
  %v401 = vsub.f32 %v374, %v385
  %v402 = vsub.f32 %v375, %v385
  %v403 = vmul.f32 %v400, %v399
  %v404 = vmul.f32 %v401, %v399
  %v405 = vmul.f32 %v402, %v399
  %v407 = vlaneseq
  %v408 = vshrl.u32 %v407, 7
  %v409 = vsub.s32 0, %v408
  %v410 = vrot.slane %v376, %v409
  %v411 = vlaneseq
  %v412 = vshrl.u32 %v411, 7
  %v413 = vsub.s32 1, %v412
  %v414 = vrot.slane %v376, %v413
  %v415 = vlaneseq
  %v416 = vshrl.u32 %v415, 7
  %v417 = vsub.s32 2, %v416
  %v418 = vrot.slane %v376, %v417
  %v422 = vmul.f32 %v403, %v410
  %v423 = vmul.f32 %v404, %v414
  %v424 = vmul.f32 %v405, %v418
  %v426 = vlaneseq
  %v427 = vshrl.u32 %v426, 7
  %v428 = vsub.s32 0, %v427
  %v429 = vrot.slane %v377, %v428
  %v430 = vlaneseq
  %v431 = vshrl.u32 %v430, 7
  %v432 = vsub.s32 1, %v431
  %v433 = vrot.slane %v377, %v432
  %v434 = vlaneseq
  %v435 = vshrl.u32 %v434, 7
  %v436 = vsub.s32 2, %v435
  %v437 = vrot.slane %v377, %v436
  %v441 = vadd.f32 %v422, %v429
  %v442 = vadd.f32 %v423, %v433
  %v443 = vadd.f32 %v424, %v437
  %v444 = vld [vmem:[%s7] sm:$0xff]
  %v445 = vld [vmem:[%s7 + $0x8] sm:$0xff]
  %v446 = vld [vmem:[%s7 + $0x10] sm:$0xff]
  %v447 = vld [vmem:[%s7 + $0x18] sm:$0xff]
  %v448 = vld [vmem:[%s7 + $0x20] sm:$0xff]
  %v449 = vld [vmem:[%s7 + $0x28] sm:$0xff]
  %v450 = vld [vmem:[%s7 + $0x30] sm:$0xff]
  %v451 = vld [vmem:[%s7 + $0x38] sm:$0xff]
  %v452 = vld [vmem:[%s7 + $0x40] sm:$0xff]
  %v453 = vld [vmem:[%s7 + $0x48] sm:$0xff]
  %v454 = vld [vmem:[%s7 + $0x50] sm:$0xff]
  %v455 = vld [vmem:[%s7 + $0x58] sm:$0xff]
  %v456 = vld [vmem:[%s7 + $0x60] sm:$0xff]
  %v457 = vld [vmem:[%s7 + $0x68] sm:$0xff]
  %v458 = vld [vmem:[%s7 + $0x70] sm:$0xff]
  %v459 = vld [vmem:[%s7 + $0x78] sm:$0xff]
  %v460 = vld [vmem:[%s7 + $0x80] sm:$0xff]
  %v461 = vld [vmem:[%s7 + $0x88] sm:$0xff]
  %v462 = vld [vmem:[%s7 + $0x90] sm:$0xff]
  %v463 = vld [vmem:[%s7 + $0x98] sm:$0xff]
  %v464 = vld [vmem:[%s7 + $0xa0] sm:$0xff]
  %v465 = vld [vmem:[%s7 + $0xa8] sm:$0xff]
  %v466 = vld [vmem:[%s7 + $0xb0] sm:$0xff]
  %v467 = vld [vmem:[%s7 + $0xb8] sm:$0xff]
  %v468 = vld [vmem:[%s7 + $0xc0] sm:$0xff]
  %v469 = vld [vmem:[%s7 + $0xc8] sm:$0xff]
  %v470 = vld [vmem:[%s7 + $0xd0] sm:$0xff]
  %v471 = vld [vmem:[%s7 + $0xd8] sm:$0xff]
  %v472 = vld [vmem:[%s7 + $0xe0] sm:$0xff]
  %v473 = vld [vmem:[%s7 + $0xe8] sm:$0xff]
  %v474 = vld [vmem:[%s7 + $0xf0] sm:$0xff]
  %v475 = vld [vmem:[%s7 + $0xf8] sm:$0xff]
  %v476 = vld [vmem:[%s7 + $0x100] sm:$0xff]
  %v477 = vld [vmem:[%s7 + $0x108] sm:$0xff]
  %v478 = vld [vmem:[%s7 + $0x110] sm:$0xff]
  %v479 = vld [vmem:[%s7 + $0x118] sm:$0xff]
  %v480 = vld [vmem:[%s7 + $0x120] sm:$0xff]
  %v481 = vld [vmem:[%s7 + $0x128] sm:$0xff]
  %v482 = vld [vmem:[%s7 + $0x130] sm:$0xff]
  %v483 = vld [vmem:[%s7 + $0x138] sm:$0xff]
  %v484 = vld [vmem:[%s7 + $0x140] sm:$0xff]
  %v485 = vld [vmem:[%s7 + $0x148] sm:$0xff]
  %v486 = vld [vmem:[%s7 + $0x150] sm:$0xff]
  %v487 = vld [vmem:[%s7 + $0x158] sm:$0xff]
  %v488 = vld [vmem:[%s7 + $0x160] sm:$0xff]
  %v489 = vld [vmem:[%s7 + $0x168] sm:$0xff]
  %v490 = vld [vmem:[%s7 + $0x170] sm:$0xff]
  %v491 = vld [vmem:[%s7 + $0x178] sm:$0xff]
  %v492 = vld [vmem:[%s7 + $0x180] sm:$0xff]
  %v493 = vld [vmem:[%s7 + $0x188] sm:$0xff]
  %v494 = vld [vmem:[%s7 + $0x190] sm:$0xff]
  %v495 = vld [vmem:[%s7 + $0x198] sm:$0xff]
  %v496 = vld [vmem:[%s7 + $0x1a0] sm:$0xff]
  %v497 = vld [vmem:[%s7 + $0x1a8] sm:$0xff]
  %v498 = vld [vmem:[%s7 + $0x1b0] sm:$0xff]
  %v499 = vld [vmem:[%s7 + $0x1b8] sm:$0xff]
  %v500 = vld [vmem:[%s7 + $0x1c0] sm:$0xff]
  %v501 = vld [vmem:[%s7 + $0x1c8] sm:$0xff]
  %v502 = vld [vmem:[%s7 + $0x1d0] sm:$0xff]
  %v503 = vld [vmem:[%s7 + $0x1d8] sm:$0xff]
  %v504 = vld [vmem:[%s7 + $0x1e0] sm:$0xff]
  %v505 = vld [vmem:[%s7 + $0x1e8] sm:$0xff]
  %v506 = vld [vmem:[%s7 + $0x1f0] sm:$0xff]
  %v507 = vld [vmem:[%s7 + $0x1f8] sm:$0xff]
  %v508 = vld [vmem:[%s7 + $0x200] sm:$0xff]
  %v509 = vld [vmem:[%s7 + $0x208] sm:$0xff]
  %v510 = vld [vmem:[%s7 + $0x210] sm:$0xff]
  %v511 = vld [vmem:[%s7 + $0x218] sm:$0xff]
  %v512 = vld [vmem:[%s7 + $0x220] sm:$0xff]
  %v513 = vld [vmem:[%s7 + $0x228] sm:$0xff]
  %v514 = vld [vmem:[%s7 + $0x230] sm:$0xff]
  %v515 = vld [vmem:[%s7 + $0x238] sm:$0xff]
  %v516 = vld [vmem:[%s7 + $0x240] sm:$0xff]
  %v517 = vld [vmem:[%s7 + $0x248] sm:$0xff]
  %v518 = vld [vmem:[%s7 + $0x250] sm:$0xf]
  %v519 = vld [vmem:[%s7 + $0x258] sm:$0xf]
  %v520 = vld [vmem:[%s8] sm:$0x3]
  %v522 = vlaneseq
  %v523 = vshrl.u32 %v522, 7
  %v524 = vsub.s32 0, %v523
  %v525 = vrot.slane %v520, %v524
  %v526 = vlaneseq
  %v527 = vshrl.u32 %v526, 7
  %v528 = vsub.s32 1, %v527
  %v529 = vrot.slane %v520, %v528
  %v533 = vsel %vm379, %v443, 0
  %v536 = vsel %vm60, %v518, 0
  %v539 = vsel %vm60, %v519, 0
  %541 = vmatprep.subr.mxu0 %v445
  %542 = vmatpush1.msra.mxu0 %v444
  %543 = vmatprep.subr.mxu0 %v447
  %544 = vmatpush1.msra.mxu0 %v446
  %545 = vmatprep.subr.mxu0 %v449
  %546 = vmatpush1.msra.mxu0 %v448
  %547 = vmatprep.subr.mxu0 %v451
  %548 = vmatpush1.msra.mxu0 %v450
  %549 = vmatprep.subr.mxu0 %v453
  %550 = vmatpush1.msra.mxu0 %v452
  %551 = vmatprep.subr.mxu0 %v455
  %552 = vmatpush1.msra.mxu0 %v454
  %553 = vmatprep.subr.mxu0 %v457
  %554 = vmatpush1.msra.mxu0 %v456
  %555 = vmatprep.subr.mxu0 %v459
  %556 = vmatpush1.msra.mxu0 %v458
  %557 = vmatprep.subr.mxu0 %v461
  %558 = vmatpush1.msra.mxu0 %v460
  %559 = vmatprep.subr.mxu0 %v463
  %560 = vmatpush1.msra.mxu0 %v462
  %561 = vmatprep.subr.mxu0 %v465
  %562 = vmatpush1.msra.mxu0 %v464
  %563 = vmatprep.subr.mxu0 %v467
  %564 = vmatpush1.msra.mxu0 %v466
  %565 = vmatprep.subr.mxu0 %v469
  %566 = vmatpush1.msra.mxu0 %v468
  %567 = vmatprep.subr.mxu0 %v471
  %568 = vmatpush1.msra.mxu0 %v470
  %569 = vmatprep.subr.mxu0 %v473
  %570 = vmatpush1.msra.mxu0 %v472
  %571 = vmatprep.subr.mxu0 %v475
  %572 = vmatpush1.msra.mxu0 %v474
  %573 = vmatprep.subr.mxu0 %v477
  %574 = vmatpush1.msra.mxu0 %v476
  %575 = vmatprep.subr.mxu0 %v479
  %576 = vmatpush1.msra.mxu0 %v478
  %577 = vmatprep.subr.mxu0 %v481
  %578 = vmatpush1.msra.mxu0 %v480
  %579 = vmatprep.subr.mxu0 %v483
  %580 = vmatpush1.msra.mxu0 %v482
  %581 = vmatprep.subr.mxu0 %v485
  %582 = vmatpush1.msra.mxu0 %v484
  %583 = vmatprep.subr.mxu0 %v487
  %584 = vmatpush1.msra.mxu0 %v486
  %585 = vmatprep.subr.mxu0 %v489
  %586 = vmatpush1.msra.mxu0 %v488
  %587 = vmatprep.subr.mxu0 %v491
  %588 = vmatpush1.msra.mxu0 %v490
  %589 = vmatprep.subr.mxu0 %v493
  %590 = vmatpush1.msra.mxu0 %v492
  %591 = vmatprep.subr.mxu0 %v495
  %592 = vmatpush1.msra.mxu0 %v494
  %593 = vmatprep.subr.mxu0 %v497
  %594 = vmatpush1.msra.mxu0 %v496
  %595 = vmatprep.subr.mxu0 %v499
  %596 = vmatpush1.msra.mxu0 %v498
  %597 = vmatprep.subr.mxu0 %v501
  %598 = vmatpush1.msra.mxu0 %v500
  %599 = vmatprep.subr.mxu0 %v503
  %600 = vmatpush1.msra.mxu0 %v502
  %601 = vmatprep.subr.mxu0 %v505
  %602 = vmatpush1.msra.mxu0 %v504
  %603 = vmatprep.subr.mxu0 %v507
  %604 = vmatpush1.msra.mxu0 %v506
  %605 = vmatprep.mubr.f32.mxu0 %v442
  %606 = vmatmul.mubr.f32.gmra.mrb[0].mxu0 %v441
  %v607 = vpop.f32.mrb[0].mxu0
  %v608 = vadd.f32 %v525, %v607
  %v609 = vpop.f32.mrb[0].mxu0
  %v610 = vadd.f32 %v529, %v609
  %611 = vdwg.mxu0
  %612 = vmatprep.subr.mxu0 %v509
  %613 = vmatpush1.msra.mxu0 %v508
  %614 = vmatprep.subr.mxu0 %v511
  %615 = vmatpush1.msra.mxu0 %v510
  %616 = vmatprep.subr.mxu0 %v513
  %617 = vmatpush1.msra.mxu0 %v512
  %618 = vmatprep.subr.mxu0 %v515
  %619 = vmatpush1.msra.mxu0 %v514
  %620 = vmatprep.subr.mxu0 %v517
  %621 = vmatpush1.msra.mxu0 %v516
  %622 = vmatprep.subr.mxu0 %v539
  %623 = vmatpush1.msra.mxu0 %v536
  %624 = vmatprep.subr.mxu0 0.0
  %625 = vmatpush1.msra.mxu0 0.0
  %626 = vmatprep.subr.mxu0 0.0
  %627 = vmatpush1.msra.mxu0 0.0
  %628 = vmatprep.subr.mxu0 0.0
  %629 = vmatpush1.msra.mxu0 0.0
  %630 = vmatprep.subr.mxu0 0.0
  %631 = vmatpush1.msra.mxu0 0.0
  %632 = vmatprep.subr.mxu0 0.0
  %633 = vmatpush1.msra.mxu0 0.0
  %634 = vmatprep.subr.mxu0 0.0
  %635 = vmatpush1.msra.mxu0 0.0
  %636 = vmatprep.subr.mxu0 0.0
  %637 = vmatpush1.msra.mxu0 0.0
  %638 = vmatprep.subr.mxu0 0.0
  %639 = vmatpush1.msra.mxu0 0.0
  %640 = vmatprep.subr.mxu0 0.0
  %641 = vmatpush1.msra.mxu0 0.0
  %642 = vmatprep.subr.mxu0 0.0
  %643 = vmatpush1.msra.mxu0 0.0
  %644 = vmatprep.subr.mxu0 0.0
  %645 = vmatpush1.msra.mxu0 0.0
  %646 = vmatprep.subr.mxu0 0.0
  %647 = vmatpush1.msra.mxu0 0.0
  %648 = vmatprep.subr.mxu0 0.0
  %649 = vmatpush1.msra.mxu0 0.0
  %650 = vmatprep.subr.mxu0 0.0
  %651 = vmatpush1.msra.mxu0 0.0
  %652 = vmatprep.subr.mxu0 0.0
  %653 = vmatpush1.msra.mxu0 0.0
  %654 = vmatprep.subr.mxu0 0.0
  %655 = vmatpush1.msra.mxu0 0.0
  %656 = vmatprep.subr.mxu0 0.0
  %657 = vmatpush1.msra.mxu0 0.0
  %658 = vmatprep.subr.mxu0 0.0
  %659 = vmatpush1.msra.mxu0 0.0
  %660 = vmatprep.subr.mxu0 0.0
  %661 = vmatpush1.msra.mxu0 0.0
  %662 = vmatprep.subr.mxu0 0.0
  %663 = vmatpush1.msra.mxu0 0.0
  %664 = vmatprep.subr.mxu0 0.0
  %665 = vmatpush1.msra.mxu0 0.0
  %666 = vmatprep.subr.mxu0 0.0
  %667 = vmatpush1.msra.mxu0 0.0
  %668 = vmatprep.subr.mxu0 0.0
  %669 = vmatpush1.msra.mxu0 0.0
  %670 = vmatprep.subr.mxu0 0.0
  %671 = vmatpush1.msra.mxu0 0.0
  %672 = vmatprep.subr.mxu0 0.0
  %673 = vmatpush1.msra.mxu0 0.0
  %674 = vmatprep.subr.mxu0 0.0
  %675 = vmatpush1.msra.mxu0 0.0
  %676 = vmatprep.mubr.f32.mxu0 0.0
  %677 = vmatmul.mubr.f32.gmra.mrb[0].mxu0 %v533
  %v678 = vpop.f32.mrb[0].mxu0
  %v679 = vadd.f32 %v608, %v678
  %v680 = vpop.f32.mrb[0].mxu0
  %v681 = vadd.f32 %v610, %v680
  %682 = vdwg.mxu0
  %v683 = vmax.f32 %v679, 0.0
  %v684 = vmax.f32 %v681, 0.0
  %v685 = vld [vmem:[%s9] sm:$0x3]
  %v686 = vld [vmem:[%s10] sm:$0x3]
  %vm687 = vcmask 588800
  %v688 = vsel %vm687, %v684, 0.0
  %v689 = vadd.f32 %v683, %v688
  %690 = vadd.xlane.f32.xlu0 %v689
  %v691 = vpop.xlane.xlu0 %690
  %v692 = vrcp.pop 200.0
  %v693 = vmul.f32 %v691, %v692
  %v694 = vmul.f32 %v683, %v683
  %v695 = vmul.f32 %v684, %v684
  %v696 = vsel %vm687, %v695, 0.0
  %v697 = vadd.f32 %v694, %v696
  %698 = vadd.xlane.f32.xlu0 %v697
  %v699 = vpop.xlane.xlu0 %698
  %v700 = vmul.f32 %v699, %v692
  %v701 = vmul.f32 %v693, %v693
  %v702 = vsub.f32 %v700, %v701
  %v703 = vmax.f32 %v702, 0.0
  %v704 = vadd.f32 %v703, 1e-05
  %v705 = vrsqrt.pop %v704
  %v706 = vsub.f32 %v683, %v693
  %v707 = vsub.f32 %v684, %v693
  %v708 = vmul.f32 %v706, %v705
  %v709 = vmul.f32 %v707, %v705
  %v711 = vlaneseq
  %v712 = vshrl.u32 %v711, 7
  %v713 = vsub.s32 0, %v712
  %v714 = vrot.slane %v685, %v713
  %v715 = vlaneseq
  %v716 = vshrl.u32 %v715, 7
  %v717 = vsub.s32 1, %v716
  %v718 = vrot.slane %v685, %v717
  %v721 = vmul.f32 %v708, %v714
  %v722 = vmul.f32 %v709, %v718
  %v724 = vlaneseq
  %v725 = vshrl.u32 %v724, 7
  %v726 = vsub.s32 0, %v725
  %v727 = vrot.slane %v686, %v726
  %v728 = vlaneseq
  %v729 = vshrl.u32 %v728, 7
  %v730 = vsub.s32 1, %v729
  %v731 = vrot.slane %v686, %v730
  %v734 = vadd.f32 %v721, %v727
  %v735 = vadd.f32 %v722, %v731
  %v736 = vld [vmem:[%s11] sm:$0x3]
  %v738 = vlaneseq
  %v739 = vshrl.u32 %v738, 7
  %v740 = vsub.s32 0, %v739
  %v741 = vrot.slane %v736, %v740
  %v742 = vlaneseq
  %v743 = vshrl.u32 %v742, 7
  %v744 = vsub.s32 1, %v743
  %v745 = vrot.slane %v736, %v744
  %v748 = vmul.f32 %v734, %v741
  %v749 = vmul.f32 %v735, %v745
  %v750 = vsel %vm687, %v749, 0.0
  %v751 = vadd.f32 %v748, %v750
  %752 = vadd.xlane.f32.xlu0 %v751
  %v753 = vpop.xlane.xlu0 %752
  %v754 = vld [vmem:[#allocation2] sm:$0x1]
  %v756 = vlaneseq
  %v757 = vshrl.u32 %v756, 7
  %v758 = vsub.s32 0, %v757
  %v759 = vrot.slane %v754, %v758
  %v761 = vadd.f32 %v753, %v759
  %vm762 = vcmask 7168
  %763 = vst.msk [vmem:[%s13] sm:$0xff] %vm762, %v761
  // Predicated region
  $region54: #{tpu_custom_call.1} parent=0 // pred_check
    _
  $region55: #{tpu_custom_call.1} parent=0 // pred_check_branch
    %765 = sbr.rel (0) target = $region57
  $region56: #{tpu_custom_call.1} parent=0 // pred_region
    _
  $region57: #{tpu_custom_call.1} parent=0 // pred_fallthru
    _
  // Predicated region
  $region58: #{tpu_custom_call.1} parent=0 // pred_check
    _
  $region59: #{tpu_custom_call.1} parent=0 // pred_check_branch
    %767 = sbr.rel (0) target = $region61
  $region60: #{tpu_custom_call.1} parent=0 // pred_region
    _
  $region61: #{tpu_custom_call.1} parent=0 // pred_fallthru
    _

</llo_original>
